<compile_context>
chip_gen: v6e
topology: v6e:2x2x1
jax: 0.10.0
libtpu: 0.0.40
codegen_flags: <defaults>
</compile_context>

<pallas_src>
import functools

import jax
import jax.numpy as jnp
from jax.experimental import pallas as pl
from jax.experimental.pallas import tpu as pltpu

_EPS = 1e-5
_LANE = 128


def _fused_mlp_bn_kernel(x_ref, w_ref, b_ref, g_ref, be_ref, o_ref, act_ref):
    """One grid step == one (Linear -> ReLU -> BatchNorm1d -> Dropout(0)) layer.

    x_ref:   [B, P]     padded input (resident; consumed at layer 0 only)
    w_ref:   [1, P, P]  this layer's padded weight (in_dim x out_dim)
    b_ref:   [1, 1, P]  padded bias
    g_ref:   [1, 1, P]  BatchNorm gamma (padded with zeros)
    be_ref:  [1, 1, P]  BatchNorm beta  (padded with zeros)
    o_ref:   [B, P]     padded output (finalized on the last layer)
    act_ref: [B, P]     VMEM scratch carrying activations between layers
    """
    l = pl.program_id(0)
    last = pl.num_programs(0) - 1

    @pl.when(l == 0)
    def _():
        act_ref[...] = x_ref[...]

    # Linear (+bias) on the MXU with f32 accumulation, then ReLU.
    h = jnp.dot(act_ref[...], w_ref[0], preferred_element_type=jnp.float32)
    h = h + b_ref[0]
    h = jnp.maximum(h, 0.0)

    # BatchNorm1d, training mode: biased per-feature batch statistics.
    mu = jnp.mean(h, axis=0, keepdims=True)
    var = jnp.mean(h * h, axis=0, keepdims=True) - mu * mu   # one-pass variance
    var = jnp.maximum(var, 0.0)                              # guard cancellation
    inv = jax.lax.rsqrt(var + _EPS)                          # EUP slot
    y = g_ref[0] * (h - mu) * inv + be_ref[0]

    @pl.when(l < last)
    def _():
        act_ref[...] = y                                     # carry to next layer

    @pl.when(l == last)
    def _():
        o_ref[...] = y.astype(o_ref.dtype)


def _round_up(n, m):
    return ((n + m - 1) // m) * m


def init_params(key, input_size, output_size, hidden_sizes):
    """Deterministic PyTorch-style Linear init + BatchNorm1d init."""
    layer_sizes = [input_size] + list(hidden_sizes) + [output_size]
    params = []
    for i in range(len(layer_sizes) - 1):
        in_dim, out_dim = layer_sizes[i], layer_sizes[i + 1]
        key, kw, kb = jax.random.split(key, 3)
        bound = 1.0 / (in_dim ** 0.5)
        # Stored as [in_dim, out_dim] (transposed vs. PyTorch's [out, in]).
        w = jax.random.uniform(kw, (in_dim, out_dim), jnp.float32, -bound, bound)
        b = jax.random.uniform(kb, (out_dim,), jnp.float32, -bound, bound)
        gamma = jnp.ones((out_dim,), jnp.float32)    # BatchNorm1d weight
        beta = jnp.zeros((out_dim,), jnp.float32)    # BatchNorm1d bias
        params.append((w, b, gamma, beta))
    return params


def pack_params(params):
    """Zero-pad and stack per-layer params into lane-dense [L, P, P] buffers."""
    dims = [params[0][0].shape[0]] + [w.shape[1] for (w, _, _, _) in params]
    P = _round_up(max(dims), _LANE)
    L = len(params)
    W = jnp.zeros((L, P, P), jnp.float32)
    Bv = jnp.zeros((L, 1, P), jnp.float32)
    G = jnp.zeros((L, 1, P), jnp.float32)
    Bt = jnp.zeros((L, 1, P), jnp.float32)
    for l, (w, b, g, be) in enumerate(params):
        kin, kout = w.shape
        W = W.at[l, :kin, :kout].set(w)
        Bv = Bv.at[l, 0, :kout].set(b)
        G = G.at[l, 0, :kout].set(g)
        Bt = Bt.at[l, 0, :kout].set(be)
    return W, Bv, G, Bt


@functools.partial(jax.jit, static_argnames=("output_size",))
def mlp_batchnorm_forward(x, W, Bv, G, Bt, *, output_size):
    L, P, _ = W.shape
    batch, in_dim = x.shape
    x_pad = jnp.zeros((batch, P), jnp.float32).at[:, :in_dim].set(x)

    out_pad = pl.pallas_call(
        _fused_mlp_bn_kernel,
        out_shape=jax.ShapeDtypeStruct((batch, P), jnp.float32),
        grid_spec=pltpu.PrefetchScalarGridSpec(
            num_scalar_prefetch=0,
            grid=(L,),                                 # one grid step per layer
            in_specs=[
                pl.BlockSpec((batch, P), lambda l: (0, 0)),    # x (resident)
                pl.BlockSpec((1, P, P), lambda l: (l, 0, 0)),  # W_l (pipelined)
                pl.BlockSpec((1, 1, P), lambda l: (l, 0, 0)),  # b_l
                pl.BlockSpec((1, 1, P), lambda l: (l, 0, 0)),  # gamma_l
                pl.BlockSpec((1, 1, P), lambda l: (l, 0, 0)),  # beta_l
            ],
            out_specs=pl.BlockSpec((batch, P), lambda l: (0, 0)),  # resident
            scratch_shapes=[pltpu.VMEM((batch, P), jnp.float32)],  # activation carry
        ),
        compiler_params=pltpu.CompilerParams(
            dimension_semantics=("arbitrary",),        # layers are sequential
        ),
    )(x_pad, W, Bv, G, Bt)
    return out_pad[:, :output_size]


if __name__ == "__main__":
    key = jax.random.PRNGKey(0)
    key, kx, kp = jax.random.split(key, 3)

    B = 8
    input_size = 32
    hidden_sizes = [64, 48]          # two hidden layers -> 3-step grid
    output_size = 16

    x = jax.random.normal(kx, (B, input_size), jnp.float32)
    params = init_params(kp, input_size, output_size, hidden_sizes)
    W, Bv, G, Bt = pack_params(params)

    out = mlp_batchnorm_forward(x, W, Bv, G, Bt, output_size=output_size)
    jax.block_until_ready(out)
    assert out.shape == (B, output_size)

    # Pure-JAX reference (same forward semantics) for a sanity check.
    ref = x
    for (w, b, g, be) in params:
        h = jnp.dot(ref, w, precision=jax.lax.Precision.HIGHEST) + b
        h = jnp.maximum(h, 0.0)
        mu = jnp.mean(h, axis=0, keepdims=True)
        var = jnp.mean((h - mu) ** 2, axis=0, keepdims=True)
        ref = g * (h - mu) * jax.lax.rsqrt(var + _EPS) + be
    max_err = float(jnp.max(jnp.abs(out - ref)))
    assert max_err < 2e-3, max_err

    print("KERNEL_OK")
</pallas_src>

<mosaic_0001>
module attributes {stable_mosaic.version = 11 : i64} {
  func.func @_fused_mlp_bn_kernel(%arg0: i32, %arg1: memref<8x128xf32, #tpu.memory_space<vmem>>, %arg2: memref<1x128x128xf32, #tpu.memory_space<vmem>>, %arg3: memref<1x1x128xf32, #tpu.memory_space<vmem>>, %arg4: memref<1x1x128xf32, #tpu.memory_space<vmem>>, %arg5: memref<1x1x128xf32, #tpu.memory_space<vmem>>, %arg6: memref<8x128xf32, #tpu.memory_space<vmem>>, %arg7: memref<8x128xf32, #tpu.memory_space<vmem>>) attributes {dimension_semantics = [#tpu.dimension_semantics<arbitrary>], iteration_bounds = array<i64: 3>, scalar_prefetch = 0 : i64, scratch_operands = 1 : i64, tpu.core_type = #tpu.core_type<tc>, window_params = [{pipeline_mode = #tpu.pipeline_mode<synchronous>, transform_indices = @transform_0, window_bounds = array<i64: 8, 128>}, {transform_indices = @transform_1, window_bounds = array<i64: 1, 128, 128>}, {transform_indices = @transform_2, window_bounds = array<i64: 1, 1, 128>}, {transform_indices = @transform_3, window_bounds = array<i64: 1, 1, 128>}, {transform_indices = @transform_4, window_bounds = array<i64: 1, 1, 128>}, {pipeline_mode = #tpu.pipeline_mode<synchronous>, transform_indices = @transform_5, window_bounds = array<i64: 8, 128>}]} {
    %c0_i32 = arith.constant 0 : i32
    %0 = arith.cmpi eq, %arg0, %c0_i32 : i32
    %1 = arith.extui %0 : i1 to i32
    %c0_i32_0 = arith.constant 0 : i32
    %2 = arith.cmpi ne, %1, %c0_i32_0 : i32
    scf.if %2 {
      %c0_24 = arith.constant 0 : index
      %c0_25 = arith.constant 0 : index
      %47 = vector.load %arg1[%c0_24, %c0_25] : memref<8x128xf32, #tpu.memory_space<vmem>>, vector<8x128xf32>
      %c0_26 = arith.constant 0 : index
      %c0_27 = arith.constant 0 : index
      %48 = vector.load %arg7[%c0_26, %c0_27] : memref<8x128xf32, #tpu.memory_space<vmem>>, vector<8x128xf32>
      tpu.vector_store %arg7[%c0_26, %c0_27], %47 {strides = array<i32>} : memref<8x128xf32, #tpu.memory_space<vmem>>, vector<8x128xf32>,
    } else {
    }
    %c0 = arith.constant 0 : index
    %c0_1 = arith.constant 0 : index
    %3 = vector.load %arg7[%c0, %c0_1] : memref<8x128xf32, #tpu.memory_space<vmem>>, vector<8x128xf32>
    %c0_2 = arith.constant 0 : index
    %c0_3 = arith.constant 0 : index
    %c0_4 = arith.constant 0 : index
    %4 = vector.load %arg2[%c0_2, %c0_3, %c0_4] : memref<1x128x128xf32, #tpu.memory_space<vmem>>, vector<1x128x128xf32>
    %5 = vector.shape_cast %4 : vector<1x128x128xf32> to vector<128x128xf32>
    %cst = arith.constant dense<0.000000e+00> : vector<8x128xf32>
    %6 = tpu.matmul %3, %5, %cst {dimension_numbers = #tpu.dot_dimension_numbers<[1], [0], [0], [1], [0, 0, 1, 1], [], []>} : vector<8x128xf32>, vector<128x128xf32>, vector<8x128xf32> -> vector<8x128xf32>
    %c0_5 = arith.constant 0 : index
    %c0_6 = arith.constant 0 : index
    %c0_7 = arith.constant 0 : index
    %7 = vector.load %arg3[%c0_5, %c0_6, %c0_7] : memref<1x1x128xf32, #tpu.memory_space<vmem>>, vector<1x1x128xf32>
    %8 = vector.shape_cast %7 : vector<1x1x128xf32> to vector<1x128xf32>
    %9 = vector.broadcast %8 : vector<1x128xf32> to vector<8x128xf32>
    %10 = arith.addf %6, %9 : vector<8x128xf32>
    %cst_8 = arith.constant 0.000000e+00 : f32
    %11 = vector.broadcast %cst_8 : f32 to vector<8x128xf32>
    %12 = arith.maximumf %10, %11 : vector<8x128xf32>
    %cst_9 = arith.constant dense<0.000000e+00> : vector<128xf32>
    %13 = vector.multi_reduction <add>, %12, %cst_9 [0] : vector<8x128xf32> to vector<128xf32>
    %14 = vector.shape_cast %13 : vector<128xf32> to vector<1x128xf32>
    %cst_10 = arith.constant 8.000000e+00 : f32
    %15 = vector.broadcast %cst_10 : f32 to vector<1x128xf32>
    %16 = arith.divf %14, %15 : vector<1x128xf32>
    %17 = arith.mulf %12, %12 : vector<8x128xf32>
    %cst_11 = arith.constant dense<0.000000e+00> : vector<128xf32>
    %18 = vector.multi_reduction <add>, %17, %cst_11 [0] : vector<8x128xf32> to vector<128xf32>
    %19 = vector.shape_cast %18 : vector<128xf32> to vector<1x128xf32>
    %cst_12 = arith.constant 8.000000e+00 : f32
    %20 = vector.broadcast %cst_12 : f32 to vector<1x128xf32>
    %21 = arith.divf %19, %20 : vector<1x128xf32>
    %22 = arith.mulf %16, %16 : vector<1x128xf32>
    %23 = arith.subf %21, %22 : vector<1x128xf32>
    %cst_13 = arith.constant 0.000000e+00 : f32
    %24 = vector.broadcast %cst_13 : f32 to vector<1x128xf32>
    %25 = arith.maximumf %23, %24 : vector<1x128xf32>
    %cst_14 = arith.constant 9.99999974E-6 : f32
    %26 = vector.broadcast %cst_14 : f32 to vector<1x128xf32>
    %27 = arith.addf %25, %26 : vector<1x128xf32>
    %28 = math.rsqrt %27 : vector<1x128xf32>
    %c0_15 = arith.constant 0 : index
    %c0_16 = arith.constant 0 : index
    %c0_17 = arith.constant 0 : index
    %29 = vector.load %arg4[%c0_15, %c0_16, %c0_17] : memref<1x1x128xf32, #tpu.memory_space<vmem>>, vector<1x1x128xf32>
    %30 = vector.shape_cast %29 : vector<1x1x128xf32> to vector<1x128xf32>
    %31 = vector.broadcast %16 : vector<1x128xf32> to vector<8x128xf32>
    %32 = arith.subf %12, %31 : vector<8x128xf32>
    %33 = vector.broadcast %30 : vector<1x128xf32> to vector<8x128xf32>
    %34 = arith.mulf %33, %32 : vector<8x128xf32>
    %35 = vector.broadcast %28 : vector<1x128xf32> to vector<8x128xf32>
    %36 = arith.mulf %34, %35 : vector<8x128xf32>
    %c0_18 = arith.constant 0 : index
    %c0_19 = arith.constant 0 : index
    %c0_20 = arith.constant 0 : index
    %37 = vector.load %arg5[%c0_18, %c0_19, %c0_20] : memref<1x1x128xf32, #tpu.memory_space<vmem>>, vector<1x1x128xf32>
    %38 = vector.shape_cast %37 : vector<1x1x128xf32> to vector<1x128xf32>
    %39 = vector.broadcast %38 : vector<1x128xf32> to vector<8x128xf32>
    %40 = arith.addf %36, %39 : vector<8x128xf32>
    %c2_i32 = arith.constant 2 : i32
    %41 = arith.cmpi slt, %arg0, %c2_i32 : i32
    %42 = arith.extui %41 : i1 to i32
    %c0_i32_21 = arith.constant 0 : i32
    %43 = arith.cmpi ne, %42, %c0_i32_21 : i32
    scf.if %43 {
      %c0_24 = arith.constant 0 : index
      %c0_25 = arith.constant 0 : index
      %47 = vector.load %arg7[%c0_24, %c0_25] : memref<8x128xf32, #tpu.memory_space<vmem>>, vector<8x128xf32>
      tpu.vector_store %arg7[%c0_24, %c0_25], %40 {strides = array<i32>} : memref<8x128xf32, #tpu.memory_space<vmem>>, vector<8x128xf32>,
    } else {
    }
    %c2_i32_22 = arith.constant 2 : i32
    %44 = arith.cmpi eq, %arg0, %c2_i32_22 : i32
    %45 = arith.extui %44 : i1 to i32
    %c0_i32_23 = arith.constant 0 : i32
    %46 = arith.cmpi ne, %45, %c0_i32_23 : i32
    scf.if %46 {
      %c0_24 = arith.constant 0 : index
      %c0_25 = arith.constant 0 : index
      %47 = vector.load %arg6[%c0_24, %c0_25] : memref<8x128xf32, #tpu.memory_space<vmem>>, vector<8x128xf32>
      tpu.vector_store %arg6[%c0_24, %c0_25], %40 {strides = array<i32>} : memref<8x128xf32, #tpu.memory_space<vmem>>, vector<8x128xf32>,
    } else {
    }
    return
  }
  func.func @transform_0(%arg0: i32) -> (i32, i32) {
    %c0_i32 = arith.constant 0 : i32
    %c0_i32_0 = arith.constant 0 : i32
    %c0_i32_1 = arith.constant 0 : i32
    return %c0_i32, %c0_i32_0 : i32, i32
  }
  func.func @transform_1(%arg0: i32) -> (i32, i32, i32) {
    %c0_i32 = arith.constant 0 : i32
    %c0_i32_0 = arith.constant 0 : i32
    %c0_i32_1 = arith.constant 0 : i32
    return %arg0, %c0_i32, %c0_i32_0 : i32, i32, i32
  }
  func.func @transform_2(%arg0: i32) -> (i32, i32, i32) {
    %c0_i32 = arith.constant 0 : i32
    %c0_i32_0 = arith.constant 0 : i32
    %c0_i32_1 = arith.constant 0 : i32
    return %arg0, %c0_i32, %c0_i32_0 : i32, i32, i32
  }
  func.func @transform_3(%arg0: i32) -> (i32, i32, i32) {
    %c0_i32 = arith.constant 0 : i32
    %c0_i32_0 = arith.constant 0 : i32
    %c0_i32_1 = arith.constant 0 : i32
    return %arg0, %c0_i32, %c0_i32_0 : i32, i32, i32
  }
  func.func @transform_4(%arg0: i32) -> (i32, i32, i32) {
    %c0_i32 = arith.constant 0 : i32
    %c0_i32_0 = arith.constant 0 : i32
    %c0_i32_1 = arith.constant 0 : i32
    return %arg0, %c0_i32, %c0_i32_0 : i32, i32, i32
  }
  func.func @transform_5(%arg0: i32) -> (i32, i32) {
    %c0_i32 = arith.constant 0 : i32
    %c0_i32_0 = arith.constant 0 : i32
    %c0_i32_1 = arith.constant 0 : i32
    return %c0_i32, %c0_i32_0 : i32, i32
  }
}

</mosaic_0001>

<llo_original>
// kernel: mlp_batchnorm_forward.1
$region0: #{mlp_batchnorm_forward.1}
  #allocation0 [shape = 'u32[]', space=smem, size = 0x4, offset = 0x4, fixed_abs, tag = 'smem constant byte address 0x4 - core index']
  #allocation1 [shape = 'u32[144,128]{1,0:T(1,128)}', space=vmem, size = 0x12000, scoped, tag = 'internal scratch']
  #allocation2 [shape = 'f32[8,128]{1,0:T(8,128)}', space=vmem, size = 0x1000, scoped, tag = 'scratch operand']
  %s0 = inlined_call_operand.vmem [shape: f32[8,128], index: 0, kind: input, shape index: {}]
  %s1 = inlined_call_operand.hbm [shape: f32[3,128,128], index: 1, kind: input, shape index: {}]
  %s2 = inlined_call_operand.vmem [shape: f32[3,1,128], index: 2, kind: input, shape index: {}]
  %s3 = inlined_call_operand.vmem [shape: f32[3,1,128], index: 3, kind: input, shape index: {}]
  %s4 = inlined_call_operand.vmem [shape: f32[3,1,128], index: 4, kind: input, shape index: {}]
  %s5 = inlined_call_operand.hbm [shape: f32[8,128], index: 5, kind: output, shape index: {}]
  %s6 = sld [smem:[#allocation0]]
  $region69: #{mlp_batchnorm_forward.1} parent=0
    _
  %s8 = ssub.s32 1, %s6
  %s9 = scalar_select 0, %s8, %s6
  $region1: #{mlp_batchnorm_forward.1} parent=0
    #allocation3 [shape = 'u8[131072]{0}', space=vmem, size = 0x20000, scoped, tag = 'input window, operand 1']
    #allocation4 [shape = 's32[2]{0}', space=sflag, size = 0x8, scoped, tag = 'scoped memory for mlp_batchnorm_forward.1']
    #allocation5 [shape = 's32[2]{0}', space=sflag, size = 0x8, scoped, tag = 'scoped memory for mlp_batchnorm_forward.1']
    #allocation6 [shape = 'u8[4096]{0}', space=vmem, size = 0x1000, scoped, tag = 'output window, operand 0, single buffered']
    %10 = vsyncpa [#allocation4], 0
    %s11 = scalar_lea.sflag [#allocation4], 1
    %12 = vsyncpa %s11, 0
    %13 = vsyncpa [#allocation5], 0
    loop: start=0, step=1, limit=5
    $region2: #{mlp_batchnorm_forward.1} parent=1 // loop_pre_header
      _
    $region3: #{mlp_batchnorm_forward.1} parent=1 // loop_header
      %s15 = sphi 0, %s19
      %p16 = scmp.ge.s32.totalorder %s15, 5
      %s23 = sphi 0, %s23
      %s25 = sphi 0, %s23
      %s26 = sphi 0, %s25
      %s40 = sphi 0, %s26
      %s46 = sphi 0, %s48
      %s49 = sphi 0, %s46
      %s50 = sphi 0, %s49
      %s66 = sphi 0, %s50
      %s72 = sphi 0, %s74
      %s75 = sphi 0, %s72
      %s76 = sphi 0, %s75
      %s92 = sphi 0, %s76
      %s98 = sphi 0, %s100
      %s101 = sphi 0, %s98
      %s102 = sphi 0, %s101
      %s118 = sphi 0, %s102
      %s124 = sphi 0, %s126
      %s127 = sphi 0, %s124
      %s128 = sphi 0, %s127
      %s144 = sphi 0, %s128
      %s148 = sphi 0, %s148
      %s150 = sphi 0, %s148
      %s151 = sphi 0, %s150
      %s165 = sphi 0, %s151
    $region4: #{mlp_batchnorm_forward.1} parent=1 // loop_header_branch
      %18 = sbr.rel (%p16) target = $region8
    $region5: #{mlp_batchnorm_forward.1} parent=1 // loop_body
      %s20 = ssub.s32 %s15, 1
      %s21 = ssub.s32 %s15, 2
      %s22 = sadd.s32 %s15, 1
      %s24 = sadd.s32 %s23, 1
      %p27 = scmp.eq.s32.totalorder %s15, 2
      %p28 = scmp.ne.s32.totalorder %s23, %s25
      %p29 = scmp.eq.s32.totalorder %s15, 0
      %p30 = por %p28, %p29
      %p31 = scmp.ne.s32.totalorder %s23, %s25
      %p32 = scmp.eq.s32.totalorder %s20, 2
      %p33 = por %p31, %p32
      %p34 = scmp.ne.s32.totalorder %s25, %s26
      %p35 = scmp.eq.s32.totalorder %s20, 0
      %p36 = por %p34, %p35
      %p37 = scmp.ne.s32.totalorder %s25, %s26
      %p38 = scmp.eq.s32.totalorder %s21, 2
      %p39 = por %p37, %p38
      %p41 = scmp.ne.s32.totalorder %s26, %s40
      %p42 = scmp.eq.s32.totalorder %s21, 0
      %p43 = por %p41, %p42
      %s44 = ssub.s32 %s15, %s22
      %p45 = scmp.eq.s32.totalorder %s44, 0
      %s47 = sadd.s32 %s46, 1
      %s48 = scalar_select %p45, %s46, %s47
      %p51 = pneg %p45
      %p52 = scmp.eq.s32.totalorder %s15, 2
      %p53 = por %p51, %p52
      %p54 = scmp.ne.s32.totalorder %s46, %s49
      %p55 = scmp.eq.s32.totalorder %s15, 0
      %p56 = por %p54, %p55
      %p57 = scmp.ne.s32.totalorder %s46, %s49
      %p58 = scmp.eq.s32.totalorder %s20, 2
      %p59 = por %p57, %p58
      %p60 = scmp.ne.s32.totalorder %s49, %s50
      %p61 = scmp.eq.s32.totalorder %s20, 0
      %p62 = por %p60, %p61
      %p63 = scmp.ne.s32.totalorder %s49, %s50
      %p64 = scmp.eq.s32.totalorder %s21, 2
      %p65 = por %p63, %p64
      %p67 = scmp.ne.s32.totalorder %s50, %s66
      %p68 = scmp.eq.s32.totalorder %s21, 0
      %p69 = por %p67, %p68
      %s70 = ssub.s32 %s15, %s22
      %p71 = scmp.eq.s32.totalorder %s70, 0
      %s73 = sadd.s32 %s72, 1
      %s74 = scalar_select %p71, %s72, %s73
      %p77 = pneg %p71
      %p78 = scmp.eq.s32.totalorder %s15, 2
      %p79 = por %p77, %p78
      %p80 = scmp.ne.s32.totalorder %s72, %s75
      %p81 = scmp.eq.s32.totalorder %s15, 0
      %p82 = por %p80, %p81
      %p83 = scmp.ne.s32.totalorder %s72, %s75
      %p84 = scmp.eq.s32.totalorder %s20, 2
      %p85 = por %p83, %p84
      %p86 = scmp.ne.s32.totalorder %s75, %s76
      %p87 = scmp.eq.s32.totalorder %s20, 0
      %p88 = por %p86, %p87
      %p89 = scmp.ne.s32.totalorder %s75, %s76
      %p90 = scmp.eq.s32.totalorder %s21, 2
      %p91 = por %p89, %p90
      %p93 = scmp.ne.s32.totalorder %s76, %s92
      %p94 = scmp.eq.s32.totalorder %s21, 0
      %p95 = por %p93, %p94
      %s96 = ssub.s32 %s15, %s22
      %p97 = scmp.eq.s32.totalorder %s96, 0
      %s99 = sadd.s32 %s98, 1
      %s100 = scalar_select %p97, %s98, %s99
      %p103 = pneg %p97
      %p104 = scmp.eq.s32.totalorder %s15, 2
      %p105 = por %p103, %p104
      %p106 = scmp.ne.s32.totalorder %s98, %s101
      %p107 = scmp.eq.s32.totalorder %s15, 0
      %p108 = por %p106, %p107
      %p109 = scmp.ne.s32.totalorder %s98, %s101
      %p110 = scmp.eq.s32.totalorder %s20, 2
      %p111 = por %p109, %p110
      %p112 = scmp.ne.s32.totalorder %s101, %s102
      %p113 = scmp.eq.s32.totalorder %s20, 0
      %p114 = por %p112, %p113
      %p115 = scmp.ne.s32.totalorder %s101, %s102
      %p116 = scmp.eq.s32.totalorder %s21, 2
      %p117 = por %p115, %p116
      %p119 = scmp.ne.s32.totalorder %s102, %s118
      %p120 = scmp.eq.s32.totalorder %s21, 0
      %p121 = por %p119, %p120
      %s122 = ssub.s32 %s15, %s22
      %p123 = scmp.eq.s32.totalorder %s122, 0
      %s125 = sadd.s32 %s124, 1
      %s126 = scalar_select %p123, %s124, %s125
      %p129 = pneg %p123
      %p130 = scmp.eq.s32.totalorder %s15, 2
      %p131 = por %p129, %p130
      %p132 = scmp.ne.s32.totalorder %s124, %s127
      %p133 = scmp.eq.s32.totalorder %s15, 0
      %p134 = por %p132, %p133
      %p135 = scmp.ne.s32.totalorder %s124, %s127
      %p136 = scmp.eq.s32.totalorder %s20, 2
      %p137 = por %p135, %p136
      %p138 = scmp.ne.s32.totalorder %s127, %s128
      %p139 = scmp.eq.s32.totalorder %s20, 0
      %p140 = por %p138, %p139
      %p141 = scmp.ne.s32.totalorder %s127, %s128
      %p142 = scmp.eq.s32.totalorder %s21, 2
      %p143 = por %p141, %p142
      %p145 = scmp.ne.s32.totalorder %s128, %s144
      %p146 = scmp.eq.s32.totalorder %s21, 0
      %p147 = por %p145, %p146
      %s149 = sadd.s32 %s148, 1
      %p152 = scmp.eq.s32.totalorder %s15, 2
      %p153 = scmp.ne.s32.totalorder %s148, %s150
      %p154 = scmp.eq.s32.totalorder %s15, 0
      %p155 = por %p153, %p154
      %p156 = scmp.ne.s32.totalorder %s148, %s150
      %p157 = scmp.eq.s32.totalorder %s20, 2
      %p158 = por %p156, %p157
      %p159 = scmp.ne.s32.totalorder %s150, %s151
      %p160 = scmp.eq.s32.totalorder %s20, 0
      %p161 = por %p159, %p160
      %p162 = scmp.ne.s32.totalorder %s150, %s151
      %p163 = scmp.eq.s32.totalorder %s21, 2
      %p164 = por %p162, %p163
      %p166 = scmp.ne.s32.totalorder %s151, %s165
      %p167 = scmp.eq.s32.totalorder %s21, 0
      %p168 = por %p166, %p167
      %p169 = scmp.le.s32.totalorder 1, %s15
      %p170 = scmp.lt.s32.totalorder %s15, 4
      %p171 = pnand %p169, %p170
      %p172 = pneg %p171
      // Predicated region
      $region9: #{mlp_batchnorm_forward.1} parent=5 // pred_check
        _
      $region10: #{mlp_batchnorm_forward.1} parent=5 // pred_check_branch
        %174 = sbr.rel (%p171) target = $region12
      $region11: #{mlp_batchnorm_forward.1} parent=5 // pred_region
        %s175 = ssub.s32 %s15, 1
        // Predicated region
        $region13: #{mlp_batchnorm_forward.1} parent=11 // pred_check
          %p176 = pneg %p36
        $region14: #{mlp_batchnorm_forward.1} parent=11 // pred_check_branch
          %178 = sbr.rel (%p176) target = $region16
        $region15: #{mlp_batchnorm_forward.1} parent=11 // pred_region
          _
        $region16: #{mlp_batchnorm_forward.1} parent=11 // pred_fallthru
          _
      $region12: #{mlp_batchnorm_forward.1} parent=5 // pred_fallthru
        _
      %p179 = scmp.lt.s32.totalorder %s15, 3
      // Predicated region
      $region17: #{mlp_batchnorm_forward.1} parent=5 // pred_check
        %p180 = pneg %p179
      $region18: #{mlp_batchnorm_forward.1} parent=5 // pred_check_branch
        %182 = sbr.rel (%p180) target = $region20
      $region19: #{mlp_batchnorm_forward.1} parent=5 // pred_region
        // Predicated region
        $region21: #{mlp_batchnorm_forward.1} parent=19 // pred_check
          %p183 = pneg %p56
        $region22: #{mlp_batchnorm_forward.1} parent=19 // pred_check_branch
          %185 = sbr.rel (%p183) target = $region24
        $region23: #{mlp_batchnorm_forward.1} parent=19 // pred_region
          %s186 = sand.u32 %s46, 1
          %s187 = scalar_lea.sflag [#allocation4], %s186
          %s188 = sand.u32 %s46, 1
          %s189 = smul.addr %s188, 128
          %s190 = scalar_lea.vmem [#allocation3], %s189
          %s192 = ssub.s32 2048, 2048
          %193 = vsyncadd %s187, %s192
          %s194 = smul.addr %s15, 16
          %s195 = smul.addr %s194, 128
          %s196 = scalar_lea.hbm %s1, %s195
          %s197 = sshll.u32 %s190, 4
          %s198 = int_to_ptr.vmem [resolvable:$true] %s197
          %203 = dma.hbm_to_vmem [thread:$0]  %s196, 2048, %s198, %s187, 128, 128, 8
        $region24: #{mlp_batchnorm_forward.1} parent=19 // pred_fallthru
          _
        // Predicated region
        $region25: #{mlp_batchnorm_forward.1} parent=19 // pred_check
          %p204 = pneg %p82
        $region26: #{mlp_batchnorm_forward.1} parent=19 // pred_check_branch
          %206 = sbr.rel (%p204) target = $region28
        $region27: #{mlp_batchnorm_forward.1} parent=19 // pred_region
          %p207 = scmp.lt.s32.totalorder %s15, 2
          %s208 = scalar_select %p207, %s15, 2
          %s209 = scalar_lea.vmem %s2, %s208
        $region28: #{mlp_batchnorm_forward.1} parent=19 // pred_fallthru
          _
        // Predicated region
        $region29: #{mlp_batchnorm_forward.1} parent=19 // pred_check
          %p210 = pneg %p108
        $region30: #{mlp_batchnorm_forward.1} parent=19 // pred_check_branch
          %212 = sbr.rel (%p210) target = $region32
        $region31: #{mlp_batchnorm_forward.1} parent=19 // pred_region
          %p213 = scmp.lt.s32.totalorder %s15, 2
          %s214 = scalar_select %p213, %s15, 2
          %s215 = scalar_lea.vmem %s3, %s214
        $region32: #{mlp_batchnorm_forward.1} parent=19 // pred_fallthru
          _
        // Predicated region
        $region33: #{mlp_batchnorm_forward.1} parent=19 // pred_check
          %p216 = pneg %p134
        $region34: #{mlp_batchnorm_forward.1} parent=19 // pred_check_branch
          %218 = sbr.rel (%p216) target = $region36
        $region35: #{mlp_batchnorm_forward.1} parent=19 // pred_region
          %p219 = scmp.lt.s32.totalorder %s15, 2
          %s220 = scalar_select %p219, %s15, 2
          %s221 = scalar_lea.vmem %s4, %s220
        $region36: #{mlp_batchnorm_forward.1} parent=19 // pred_fallthru
          _
      $region20: #{mlp_batchnorm_forward.1} parent=5 // pred_fallthru
        _
      %p222 = scmp.le.s32.totalorder 1, %s15
      %p223 = scmp.lt.s32.totalorder %s15, 4
      %p224 = pnand %p222, %p223
      %p225 = pneg %p224
      // Predicated region
      $region37: #{mlp_batchnorm_forward.1} parent=5 // pred_check
        _
      $region38: #{mlp_batchnorm_forward.1} parent=5 // pred_check_branch
        %227 = sbr.rel (%p224) target = $region40
      $region39: #{mlp_batchnorm_forward.1} parent=5 // pred_region
        %s228 = ssub.s32 %s15, 1
        %s229 = sand.u32 %s49, 1
        %s230 = scalar_lea.sflag [#allocation4], %s229
        %s231 = sand.u32 %s49, 1
        %s232 = smul.addr %s231, 128
        %s233 = scalar_lea.vmem [#allocation3], %s232
        // Predicated region
        $region41: #{mlp_batchnorm_forward.1} parent=39 // pred_check
          %p234 = pneg %p62
        $region42: #{mlp_batchnorm_forward.1} parent=39 // pred_check_branch
          %236 = sbr.rel (%p234) target = $region44
        $region43: #{mlp_batchnorm_forward.1} parent=39 // pred_region
          %237 = dma.done %s230, 2048
        $region44: #{mlp_batchnorm_forward.1} parent=39 // pred_fallthru
          _
        %p238 = pneg %p36
        %p239 = pneg %p33
        %s240 = sand.u32 %s49, 1
        %s241 = scalar_lea.sflag [#allocation4], %s240
        %s242 = sand.u32 %s49, 1
        %s243 = smul.addr %s242, 128
        %s244 = scalar_lea.vmem [#allocation3], %s243
        %p245 = pneg %p62
        %p246 = pneg %p59
        %p247 = scmp.lt.s32.totalorder %s20, 2
        %s248 = scalar_select %p247, %s20, 2
        %s249 = scalar_lea.vmem %s2, %s248
        %p250 = pneg %p88
        %p251 = pneg %p85
        %p252 = scmp.lt.s32.totalorder %s20, 2
        %s253 = scalar_select %p252, %s20, 2
        %s254 = scalar_lea.vmem %s3, %s253
        %p255 = pneg %p114
        %p256 = pneg %p111
        %p257 = scmp.lt.s32.totalorder %s20, 2
        %s258 = scalar_select %p257, %s20, 2
        %s259 = scalar_lea.vmem %s4, %s258
        %p260 = pneg %p140
        %p261 = pneg %p137
        %p262 = pneg %p161
        %p263 = pneg %p158
        %p264 = scmp.lt.s32.totalorder %s20, 2
        %s265 = scalar_select %p264, %s20, 2
        %s266 = scalar_lea.vmem %s2, %s265
        %p267 = scmp.lt.s32.totalorder %s20, 2
        %s268 = scalar_select %p267, %s20, 2
        %s269 = scalar_lea.vmem %s3, %s268
        %p270 = scmp.lt.s32.totalorder %s20, 2
        %s271 = scalar_select %p270, %s20, 2
        %s272 = scalar_lea.vmem %s4, %s271
        %p273 = scmp.eq.s32.totalorder %s20, 0
        // Predicated region
        $region45: #{mlp_batchnorm_forward.1} parent=39 // pred_check
          %p274 = pneg %p273
        $region46: #{mlp_batchnorm_forward.1} parent=39 // pred_check_branch
          %276 = sbr.rel (%p274) target = $region48
        $region47: #{mlp_batchnorm_forward.1} parent=39 // pred_region
          %v277 = vld [vmem:[%s0] sm:$0xff]
          %278 = vst [vmem:[#allocation2] sm:$0xff] %v277
        $region48: #{mlp_batchnorm_forward.1} parent=39 // pred_fallthru
          _
        %v279 = vld [vmem:[#allocation2] sm:$0xff]
        %v280 = vld [vmem:[%s233] sm:$0xff]
        %v281 = vld [vmem:[%s233 + $0x8] sm:$0xff]
        %v282 = vld [vmem:[%s233 + $0x10] sm:$0xff]
        %v283 = vld [vmem:[%s233 + $0x18] sm:$0xff]
        %v284 = vld [vmem:[%s233 + $0x20] sm:$0xff]
        %v285 = vld [vmem:[%s233 + $0x28] sm:$0xff]
        %v286 = vld [vmem:[%s233 + $0x30] sm:$0xff]
        %v287 = vld [vmem:[%s233 + $0x38] sm:$0xff]
        %v288 = vld [vmem:[%s233 + $0x40] sm:$0xff]
        %v289 = vld [vmem:[%s233 + $0x48] sm:$0xff]
        %v290 = vld [vmem:[%s233 + $0x50] sm:$0xff]
        %v291 = vld [vmem:[%s233 + $0x58] sm:$0xff]
        %v292 = vld [vmem:[%s233 + $0x60] sm:$0xff]
        %v293 = vld [vmem:[%s233 + $0x68] sm:$0xff]
        %v294 = vld [vmem:[%s233 + $0x70] sm:$0xff]
        %v295 = vld [vmem:[%s233 + $0x78] sm:$0xff]
        %v296 = vld [vmem:[%s266] sm:$0x1]
        %v298 = vlaneseq
        %v299 = vshrl.u32 %v298, 7
        %v300 = vsub.s32 0, %v299
        %v301 = vrot.slane %v296, %v300
        %303 = vmatprep.subr.mxu0 0.0
        %304 = vmatpush1.msra.mxu0 %v295
        %305 = vmatprep.subr.mxu0 0.0
        %306 = vmatpush1.msra.mxu0 %v294
        %307 = vmatprep.subr.mxu0 0.0
        %308 = vmatpush1.msra.mxu0 %v293
        %309 = vmatprep.subr.mxu0 0.0
        %310 = vmatpush1.msra.mxu0 %v292
        %311 = vmatprep.subr.mxu0 0.0
        %312 = vmatpush1.msra.mxu0 %v291
        %313 = vmatprep.subr.mxu0 0.0
        %314 = vmatpush1.msra.mxu0 %v290
        %315 = vmatprep.subr.mxu0 0.0
        %316 = vmatpush1.msra.mxu0 %v289
        %317 = vmatprep.subr.mxu0 0.0
        %318 = vmatpush1.msra.mxu0 %v288
        %319 = vmatprep.subr.mxu0 0.0
        %320 = vmatpush1.msra.mxu0 %v287
        %321 = vmatprep.subr.mxu0 0.0
        %322 = vmatpush1.msra.mxu0 %v286
        %323 = vmatprep.subr.mxu0 0.0
        %324 = vmatpush1.msra.mxu0 %v285
        %325 = vmatprep.subr.mxu0 0.0
        %326 = vmatpush1.msra.mxu0 %v284
        %327 = vmatprep.subr.mxu0 0.0
        %328 = vmatpush1.msra.mxu0 %v283
        %329 = vmatprep.subr.mxu0 0.0
        %330 = vmatpush1.msra.mxu0 %v282
        %331 = vmatprep.subr.mxu0 0.0
        %332 = vmatpush1.msra.mxu0 %v281
        %333 = vmatprep.subr.mxu0 0.0
        %334 = vmatpush1.msra.mxu0 %v280
        %335 = vmatprep.subr.mxu0 0.0
        %336 = vmatpush2.msra.mxu0 0.0
        %337 = vmatprep.subr.mxu0 0.0
        %338 = vmatpush2.msra.mxu0 0.0
        %339 = vmatprep.subr.mxu0 0.0
        %340 = vmatpush2.msra.mxu0 0.0
        %341 = vmatprep.subr.mxu0 0.0
        %342 = vmatpush2.msra.mxu0 0.0
        %343 = vmatprep.subr.mxu0 0.0
        %344 = vmatpush2.msra.mxu0 0.0
        %345 = vmatprep.subr.mxu0 0.0
        %346 = vmatpush2.msra.mxu0 0.0
        %347 = vmatprep.subr.mxu0 0.0
        %348 = vmatpush2.msra.mxu0 0.0
        %349 = vmatprep.subr.mxu0 0.0
        %350 = vmatpush2.msra.mxu0 0.0
        %351 = vmatprep.subr.mxu0 0.0
        %352 = vmatpush2.msra.mxu0 0.0
        %353 = vmatprep.subr.mxu0 0.0
        %354 = vmatpush2.msra.mxu0 0.0
        %355 = vmatprep.subr.mxu0 0.0
        %356 = vmatpush2.msra.mxu0 0.0
        %357 = vmatprep.subr.mxu0 0.0
        %358 = vmatpush2.msra.mxu0 0.0
        %359 = vmatprep.subr.mxu0 0.0
        %360 = vmatpush2.msra.mxu0 0.0
        %361 = vmatprep.subr.mxu0 0.0
        %362 = vmatpush2.msra.mxu0 0.0
        %363 = vmatprep.subr.mxu0 0.0
        %364 = vmatpush2.msra.mxu0 0.0
        %365 = vmatprep.subr.mxu0 0.0
        %366 = vmatpush2.msra.mxu0 0.0
        %367 = vmatprep.mubr.f32.mxu0 0.0
        %368 = vmatmul.mubr.f32.gmra.mxu0 %v279
        %v369 = vpop.f32.mrf.mxu0
        %v370 = vadd.f32 %v301, %v369
        %v371 = vpop.f32.mrf.mxu0
        %372 = vdwg.mxu0
        %v373 = vmax.f32 %v370, 0.0
        %v374 = vrot.slane %v373, 4
        %v375 = vadd.f32 %v373, %v374
        %v376 = vrot.slane %v375, 2
        %v377 = vadd.f32 %v375, %v376
        %v378 = vrot.slane %v377, 1
        %v379 = vadd.f32 %v377, %v378
        %v380 = vrcp.pop 8.0
        %v381 = vmul.f32 %v379, %v380
        %v382 = vmul.f32 %v373, %v373
        %v383 = vrot.slane %v382, 4
        %v384 = vadd.f32 %v382, %v383
        %v385 = vrot.slane %v384, 2
        %v386 = vadd.f32 %v384, %v385
        %v387 = vrot.slane %v386, 1
        %v388 = vadd.f32 %v386, %v387
        %v389 = vmul.f32 %v388, %v380
        %v390 = vmul.f32 %v381, %v381
        %v391 = vsub.f32 %v389, %v390
        %v392 = vmax.f32 %v391, 0.0
        %v393 = vadd.f32 %v392, 1e-05
        %v394 = vrsqrt.pop %v393
        %v395 = vld [vmem:[%s269] sm:$0x1]
        %v396 = vsub.f32 %v373, %v381
        %v398 = vlaneseq
        %v399 = vshrl.u32 %v398, 7
        %v400 = vsub.s32 0, %v399
        %v401 = vrot.slane %v395, %v400
        %v403 = vmul.f32 %v401, %v396
        %v404 = vmul.f32 %v403, %v394
        %v405 = vld [vmem:[%s272] sm:$0x1]
        %v407 = vlaneseq
        %v408 = vshrl.u32 %v407, 7
        %v409 = vsub.s32 0, %v408
        %v410 = vrot.slane %v405, %v409
        %v412 = vadd.f32 %v404, %v410
        %p413 = scmp.lt.s32.totalorder %s20, 2
        // Predicated region
        $region49: #{mlp_batchnorm_forward.1} parent=39 // pred_check
          %p414 = pneg %p413
        $region50: #{mlp_batchnorm_forward.1} parent=39 // pred_check_branch
          %416 = sbr.rel (%p414) target = $region52
        $region51: #{mlp_batchnorm_forward.1} parent=39 // pred_region
          %417 = vst [vmem:[#allocation2] sm:$0xff] %v412
        $region52: #{mlp_batchnorm_forward.1} parent=39 // pred_fallthru
          _
        %p418 = scmp.eq.s32.totalorder %s20, 2
        // Predicated region
        $region53: #{mlp_batchnorm_forward.1} parent=39 // pred_check
          %p419 = pneg %p418
        $region54: #{mlp_batchnorm_forward.1} parent=39 // pred_check_branch
          %421 = sbr.rel (%p419) target = $region56
        $region55: #{mlp_batchnorm_forward.1} parent=39 // pred_region
          %422 = vst [vmem:[#allocation6] sm:$0xff] %v412
        $region56: #{mlp_batchnorm_forward.1} parent=39 // pred_fallthru
          _
        // Predicated region
        $region57: #{mlp_batchnorm_forward.1} parent=39 // pred_check
          %p423 = pneg %p158
        $region58: #{mlp_batchnorm_forward.1} parent=39 // pred_check_branch
          %425 = sbr.rel (%p423) target = $region60
        $region59: #{mlp_batchnorm_forward.1} parent=39 // pred_region
          %s427 = ssub.s32 128, 128
          %428 = vsyncadd [#allocation5], %s427
          %s430 = sshll.u32 [#allocation6], 4
          %s431 = int_to_ptr.vmem [resolvable:$true] %s430
          %433 = dma.vmem_to_hbm [thread:$0]  %s431, 128, %s5, [#allocation5]
        $region60: #{mlp_batchnorm_forward.1} parent=39 // pred_fallthru
          _
        // Predicated region
        $region61: #{mlp_batchnorm_forward.1} parent=39 // pred_check
          %p434 = pneg %p158
        $region62: #{mlp_batchnorm_forward.1} parent=39 // pred_check_branch
          %436 = sbr.rel (%p434) target = $region64
        $region63: #{mlp_batchnorm_forward.1} parent=39 // pred_region
          %437 = dma.done [#allocation5], 128
        $region64: #{mlp_batchnorm_forward.1} parent=39 // pred_fallthru
          _
      $region40: #{mlp_batchnorm_forward.1} parent=5 // pred_fallthru
        _
      %p438 = scmp.le.s32.totalorder 2, %s15
      // Predicated region
      $region65: #{mlp_batchnorm_forward.1} parent=5 // pred_check
        %p439 = pneg %p438
      $region66: #{mlp_batchnorm_forward.1} parent=5 // pred_check_branch
        %441 = sbr.rel (%p439) target = $region68
      $region67: #{mlp_batchnorm_forward.1} parent=5 // pred_region
        %s442 = ssub.s32 %s15, 2
      $region68: #{mlp_batchnorm_forward.1} parent=5 // pred_fallthru
        _
    $region6: #{mlp_batchnorm_forward.1} parent=1 // loop_footer
      %s19 = sadd.s32 1, %s15
    $region7: #{mlp_batchnorm_forward.1} parent=1 // loop_footer_branch
      %14 = sbr.rel target = $region3
    $region8: #{mlp_batchnorm_forward.1} parent=1 // loop_exit
      _
    %443 = vsyncpa [#allocation4], 1
    %s444 = scalar_lea.sflag [#allocation4], 1
    %445 = vsyncpa %s444, 1
    %446 = vsyncpa [#allocation5], 1
    %s447 = scalar_lea.sflag [#allocation5], 1
    %448 = vsyncpa %s447, 1

</llo_original>
